<compile_context>
chip_gen: v5e
topology: v5e:2x2
jax: 0.10.0
libtpu: 0.0.40
codegen_flags: <defaults>
</compile_context>

<pallas_src>
import functools

import jax
import jax.numpy as jnp
from jax.experimental import pallas as pl
from jax.experimental.pallas import tpu as pltpu

LANE = 128
MAX_TM = 2048          # rows per grid step: 2048*128*4B = 1 MiB per input block
NEG_FILL = -1e30       # logit fill for invalid elements: bce term -> 0, sigmoid -> 0


def _partials_kernel(x_ref, t_ref, o_ref, *, tm, fold_rows, rows, ragged):
    """Per-block partial sums for the BCE-with-logits + Jaccard composite.

    For its (tm, 128) tile each grid step writes a (3, fold_rows, 128) block:
      [0] sum of per-element BCE-with-logits terms
      [1] sum of sigmoid(x) * 1[t == 1]      (Jaccard intersection)
      [2] sum of sigmoid(x) + 1[t == 1]      (Jaccard union, pre-subtraction)
    folded along the sublane axis with pure VPU adds — no per-step cross-lane
    reductions and no accumulator carried across the grid.
    """

    def emit(xv, tv):
        e = jnp.exp(-jnp.abs(xv))                          # shared by BCE & sigmoid
        bce = jnp.maximum(xv, 0.0) - xv * tv + jnp.log1p(e)
        inv = 1.0 / (1.0 + e)
        sig = jnp.where(xv >= 0.0, inv, e * inv)           # sigmoid(x) from e
        jt = (tv == 1.0).astype(jnp.float32)

        if fold_rows == tm:
            fold = lambda v: v
        else:
            fold = lambda v: v.reshape(tm // fold_rows, fold_rows, LANE).sum(axis=0)

        o_ref[0, 0] = fold(bce)
        o_ref[0, 1] = fold(sig * jt)
        o_ref[0, 2] = fold(sig + jt)

    x = x_ref[...].astype(jnp.float32)
    t = t_ref[...].astype(jnp.float32)

    if not ragged:
        emit(x, t)
    else:
        i = pl.program_id(0)
        last = pl.num_programs(0) - 1

        @pl.when(i != last)
        def _fast():                       # steady state: no mask work at all
            emit(x, t)

        @pl.when(i == last)
        def _masked():                     # only the ragged tail pays the mask
            r = jax.lax.broadcasted_iota(jnp.int32, (tm, LANE), 0)
            valid = (i * tm + r) < rows
            emit(jnp.where(valid, x, jnp.float32(NEG_FILL)),
                 jnp.where(valid, t, jnp.float32(0.0)))


def torch_composite_loss_pallas(outputs, targets, w_bce=10.0, w_jacc=2.5):
    """Pallas implementation of TorchCompositeLoss.forward for the
    {'bcewithlogits': w_bce, 'jaccard': w_jacc} composite.

    outputs, targets: same-shape (e.g. NCHW) float arrays.  Returns scalar f32.
    """
    # TODO(synk): only the standard {'bcewithlogits','jaccard'} composite is
    # implemented; arbitrary torch_losses entries are not translated.
    assert outputs.shape == targets.shape
    n = int(outputs.size)

    def prep(a):
        if a.dtype not in (jnp.float32, jnp.bfloat16):
            a = a.astype(jnp.float32)
        return a.reshape(-1)               # contiguous reshape: zero copy

    x = prep(outputs)
    t = prep(targets)

    # Lane-dense zero-copy view when n % 128 == 0 (the common case for NCHW
    # segmentation tensors).  Otherwise pad only the <128-element tail with
    # values that contribute exactly zero to every partial sum.
    if n % LANE != 0:
        pad = LANE - n % LANE
        x = jnp.pad(x.astype(jnp.float32), (0, pad), constant_values=NEG_FILL)
        t = jnp.pad(t.astype(jnp.float32), (0, pad), constant_values=0.0)

    rows = x.size // LANE
    x = x.reshape(rows, LANE)
    t = t.reshape(rows, LANE)

    tm = rows if rows <= MAX_TM else MAX_TM
    nblocks = pl.cdiv(rows, tm)
    ragged = rows % tm != 0
    fold_rows = 8 if tm % 8 == 0 else tm   # tiny-input fallback: no fold

    kernel = functools.partial(_partials_kernel, tm=tm, fold_rows=fold_rows,
                               rows=rows, ragged=ragged)

    partials = pl.pallas_call(
        kernel,
        out_shape=jax.ShapeDtypeStruct((nblocks, 3, fold_rows, LANE), jnp.float32),
        grid=(nblocks,),
        in_specs=[pl.BlockSpec((tm, LANE), lambda i: (i, 0)),
                  pl.BlockSpec((tm, LANE), lambda i: (i, 0))],
        out_specs=pl.BlockSpec((1, 3, fold_rows, LANE), lambda i: (i, 0, 0, 0)),
        compiler_params=pltpu.CompilerParams(
            dimension_semantics=("parallel",)),   # v7x: blocks split across 2 TCs
    )(x, t)

    # Tiny JAX-side finalize: reduce (nblocks, 3, fold_rows, 128) partials and
    # combine into the scalar composite loss.
    s = jnp.sum(partials, axis=(0, 2, 3))                 # (3,)
    bce_mean = s[0] / jnp.float32(n)
    eps = jnp.float32(1e-15)
    inter, union = s[1], s[2]
    jaccard_score = (inter + eps) / (union - inter + eps)
    jaccard_loss = jnp.float32(1.0) - jaccard_score
    return jnp.float32(w_bce) * bce_mean + jnp.float32(w_jacc) * jaccard_loss


def _reference_loss(outputs, targets, w_bce=10.0, w_jacc=2.5):
    """Pure-JAX reference mirroring nn.BCEWithLogitsLoss + TorchJaccardLoss."""
    x = outputs.astype(jnp.float32)
    t = targets.astype(jnp.float32)
    bce = jnp.mean(jnp.maximum(x, 0.0) - x * t + jnp.log1p(jnp.exp(-jnp.abs(x))))
    eps = 1e-15
    sig = jax.nn.sigmoid(x)
    jt = (t == 1.0).astype(jnp.float32)
    inter = jnp.sum(sig * jt)
    union = jnp.sum(sig) + jnp.sum(jt)
    jacc = (inter + eps) / (union - inter + eps)
    return w_bce * bce + w_jacc * (1.0 - jacc)


if __name__ == "__main__":
    key = jax.random.PRNGKey(0)
    k1, k2 = jax.random.split(key)
    # NCHW, small shapes: batch=2, channels=4, spatial=16
    outputs = jax.random.normal(k1, (2, 4, 16, 16), dtype=jnp.float32)
    targets = (jax.random.uniform(k2, (2, 4, 16, 16)) > 0.5).astype(jnp.float32)

    loss = torch_composite_loss_pallas(outputs, targets)
    loss = jax.block_until_ready(loss)

    ref = _reference_loss(outputs, targets)
    assert jnp.allclose(loss, ref, rtol=1e-4, atol=1e-4), (loss, ref)
    print("KERNEL_OK")
</pallas_src>

<mosaic_0001>
module attributes {stable_mosaic.version = 11 : i64} {
  func.func @_partials_kernel(%arg0: i32, %arg1: memref<16x128xf32, #tpu.memory_space<vmem>>, %arg2: memref<16x128xf32, #tpu.memory_space<vmem>>, %arg3: memref<1x3x8x128xf32, #tpu.memory_space<vmem>>) attributes {dimension_semantics = [#tpu.dimension_semantics<parallel>], iteration_bounds = array<i64: 1>, scalar_prefetch = 0 : i64, scratch_operands = 0 : i64, tpu.core_type = #tpu.core_type<tc>, window_params = [{transform_indices = @transform_0, window_bounds = array<i64: 16, 128>}, {transform_indices = @transform_1, window_bounds = array<i64: 16, 128>}, {transform_indices = @transform_2, window_bounds = array<i64: 1, 3, 8, 128>}]} {
    %c0 = arith.constant 0 : index
    %c0_0 = arith.constant 0 : index
    %0 = vector.load %arg1[%c0, %c0_0] : memref<16x128xf32, #tpu.memory_space<vmem>>, vector<16x128xf32>
    %c0_1 = arith.constant 0 : index
    %c0_2 = arith.constant 0 : index
    %1 = vector.load %arg2[%c0_1, %c0_2] : memref<16x128xf32, #tpu.memory_space<vmem>>, vector<16x128xf32>
    %2 = math.absf %0 : vector<16x128xf32>
    %cst = arith.constant 0.000000e+00 : f32
    %3 = vector.broadcast %cst : f32 to vector<16x128xf32>
    %4 = arith.subf %3, %2 : vector<16x128xf32>
    %5 = math.exp %4 : vector<16x128xf32>
    %cst_3 = arith.constant 0.000000e+00 : f32
    %6 = vector.broadcast %cst_3 : f32 to vector<16x128xf32>
    %7 = arith.maximumf %0, %6 : vector<16x128xf32>
    %8 = arith.mulf %0, %1 : vector<16x128xf32>
    %9 = arith.subf %7, %8 : vector<16x128xf32>
    %10 = math.log1p %5 : vector<16x128xf32>
    %11 = arith.addf %9, %10 : vector<16x128xf32>
    %cst_4 = arith.constant 1.000000e+00 : f32
    %12 = vector.broadcast %cst_4 : f32 to vector<16x128xf32>
    %13 = arith.addf %12, %5 : vector<16x128xf32>
    %cst_5 = arith.constant 1.000000e+00 : f32
    %14 = vector.broadcast %cst_5 : f32 to vector<16x128xf32>
    %15 = arith.divf %14, %13 : vector<16x128xf32>
    %cst_6 = arith.constant 0.000000e+00 : f32
    %16 = vector.broadcast %cst_6 : f32 to vector<16x128xf32>
    %17 = arith.cmpf oge, %0, %16 : vector<16x128xf32>
    %18 = arith.mulf %5, %15 : vector<16x128xf32>
    %19 = arith.select %17, %15, %18 : vector<16x128xi1>, vector<16x128xf32>
    %cst_7 = arith.constant 1.000000e+00 : f32
    %20 = vector.broadcast %cst_7 : f32 to vector<16x128xf32>
    %21 = arith.cmpf oeq, %1, %20 : vector<16x128xf32>
    %22 = arith.extui %21 : vector<16x128xi1> to vector<16x128xi32>
    %23 = arith.sitofp %22 : vector<16x128xi32> to vector<16x128xf32>
    %24 = vector.shape_cast %11 : vector<16x128xf32> to vector<2x8x128xf32>
    %cst_8 = arith.constant dense<0.000000e+00> : vector<8x128xf32>
    %25 = vector.multi_reduction <add>, %24, %cst_8 [0] : vector<2x8x128xf32> to vector<8x128xf32>
    %c0_9 = arith.constant 0 : index
    %c0_10 = arith.constant 0 : index
    %c0_11 = arith.constant 0 : index
    %c0_12 = arith.constant 0 : index
    %26 = vector.load %arg3[%c0_9, %c0_10, %c0_11, %c0_12] : memref<1x3x8x128xf32, #tpu.memory_space<vmem>>, vector<1x1x8x128xf32>
    %27 = vector.shape_cast %26 : vector<1x1x8x128xf32> to vector<8x128xf32>
    %28 = vector.shape_cast %25 : vector<8x128xf32> to vector<1x1x8x128xf32>
    tpu.vector_store %arg3[%c0_9, %c0_10, %c0_11, %c0_12], %28 {strides = array<i32>} : memref<1x3x8x128xf32, #tpu.memory_space<vmem>>, vector<1x1x8x128xf32>,
    %29 = arith.mulf %19, %23 : vector<16x128xf32>
    %30 = vector.shape_cast %29 : vector<16x128xf32> to vector<2x8x128xf32>
    %cst_13 = arith.constant dense<0.000000e+00> : vector<8x128xf32>
    %31 = vector.multi_reduction <add>, %30, %cst_13 [0] : vector<2x8x128xf32> to vector<8x128xf32>
    %c0_14 = arith.constant 0 : index
    %c1 = arith.constant 1 : index
    %c0_15 = arith.constant 0 : index
    %c0_16 = arith.constant 0 : index
    %32 = vector.load %arg3[%c0_14, %c1, %c0_15, %c0_16] : memref<1x3x8x128xf32, #tpu.memory_space<vmem>>, vector<1x1x8x128xf32>
    %33 = vector.shape_cast %32 : vector<1x1x8x128xf32> to vector<8x128xf32>
    %34 = vector.shape_cast %31 : vector<8x128xf32> to vector<1x1x8x128xf32>
    tpu.vector_store %arg3[%c0_14, %c1, %c0_15, %c0_16], %34 {strides = array<i32>} : memref<1x3x8x128xf32, #tpu.memory_space<vmem>>, vector<1x1x8x128xf32>,
    %35 = arith.addf %19, %23 : vector<16x128xf32>
    %36 = vector.shape_cast %35 : vector<16x128xf32> to vector<2x8x128xf32>
    %cst_17 = arith.constant dense<0.000000e+00> : vector<8x128xf32>
    %37 = vector.multi_reduction <add>, %36, %cst_17 [0] : vector<2x8x128xf32> to vector<8x128xf32>
    %c0_18 = arith.constant 0 : index
    %c2 = arith.constant 2 : index
    %c0_19 = arith.constant 0 : index
    %c0_20 = arith.constant 0 : index
    %38 = vector.load %arg3[%c0_18, %c2, %c0_19, %c0_20] : memref<1x3x8x128xf32, #tpu.memory_space<vmem>>, vector<1x1x8x128xf32>
    %39 = vector.shape_cast %38 : vector<1x1x8x128xf32> to vector<8x128xf32>
    %40 = vector.shape_cast %37 : vector<8x128xf32> to vector<1x1x8x128xf32>
    tpu.vector_store %arg3[%c0_18, %c2, %c0_19, %c0_20], %40 {strides = array<i32>} : memref<1x3x8x128xf32, #tpu.memory_space<vmem>>, vector<1x1x8x128xf32>,
    return
  }
  func.func @transform_0(%arg0: i32) -> (i32, i32) {
    %c0_i32 = arith.constant 0 : i32
    %c0_i32_0 = arith.constant 0 : i32
    return %arg0, %c0_i32 : i32, i32
  }
  func.func @transform_1(%arg0: i32) -> (i32, i32) {
    %c0_i32 = arith.constant 0 : i32
    %c0_i32_0 = arith.constant 0 : i32
    return %arg0, %c0_i32 : i32, i32
  }
  func.func @transform_2(%arg0: i32) -> (i32, i32, i32, i32) {
    %c0_i32 = arith.constant 0 : i32
    %c0_i32_0 = arith.constant 0 : i32
    %c0_i32_1 = arith.constant 0 : i32
    %c0_i32_2 = arith.constant 0 : i32
    return %arg0, %c0_i32, %c0_i32_0, %c0_i32_1 : i32, i32, i32, i32
  }
}

</mosaic_0001>

<llo_original>
// kernel: tpu_custom_call.1
$region0: #{tpu_custom_call.1}
  #allocation0 [shape = 'u32[]', space=smem, size = 0x4, offset = 0x4, fixed_abs, tag = 'smem constant byte address 0x4 - core index']
  #allocation1 [shape = 'u32[72,128]{1,0:T(1,128)}', space=vmem, size = 0x9000, scoped, tag = 'internal scratch']
  %s0 = inlined_call_operand.hbm [shape: f32[16,128], index: 0, kind: input, shape index: {}]
  %s1 = inlined_call_operand.hbm [shape: f32[16,128], index: 1, kind: input, shape index: {}]
  %s2 = inlined_call_operand.hbm [shape: f32[1,3,8,128], index: 2, kind: output, shape index: {}]
  %s3 = sld [smem:[#allocation0]]
  $region26: #{tpu_custom_call.1} parent=0
    _
  %s5 = ssub.s32 1, %s3
  %s6 = scalar_select 0, %s5, %s3
  $region1: #{tpu_custom_call.1} parent=0
    #allocation2 [shape = 'u8[8192]{0}', space=vmem, size = 0x2000, scoped, tag = 'input window, operand 0, single buffered']
    #allocation3 [shape = 's32[1]{0}', space=sflag, size = 0x4, scoped, tag = 'scoped memory for tpu_custom_call.1']
    #allocation4 [shape = 's32[1]{0}', space=sflag, size = 0x4, scoped, tag = 'scoped memory for tpu_custom_call.1']
    #allocation5 [shape = 'u8[8192]{0}', space=vmem, size = 0x2000, scoped, tag = 'input window, operand 1, single buffered']
    #allocation6 [shape = 's32[1]{0}', space=sflag, size = 0x4, scoped, tag = 'scoped memory for tpu_custom_call.1']
    #allocation7 [shape = 'u8[12288]{0}', space=vmem, size = 0x3000, scoped, tag = 'output window, operand 0, single buffered']
    %7 = vsyncpa [#allocation3], 0
    %8 = vsyncpa [#allocation6], 0
    %9 = vsyncpa [#allocation4], 0
    // Predicated region
    $region2: #{tpu_custom_call.1} parent=1 // pred_check
      _
    $region3: #{tpu_custom_call.1} parent=1 // pred_check_branch
      %11 = sbr.rel (0) target = $region5
    $region4: #{tpu_custom_call.1} parent=1 // pred_region
      %13 = vsyncadd [#allocation3], 0
      %s14 = sshll.u32 %s0, 4
      %s15 = int_to_ptr.hbm [resolvable:$true] %s14
      %s16 = sshll.u32 [#allocation2], 4
      %s17 = int_to_ptr.vmem [resolvable:$true] %s16
      %22 = dma.hbm_to_vmem [thread:$0]  %s15, 256, %s17, [#allocation3], 128, 128, 8
    $region5: #{tpu_custom_call.1} parent=1 // pred_fallthru
      _
    // Predicated region
    $region6: #{tpu_custom_call.1} parent=1 // pred_check
      _
    $region7: #{tpu_custom_call.1} parent=1 // pred_check_branch
      %24 = sbr.rel (0) target = $region9
    $region8: #{tpu_custom_call.1} parent=1 // pred_region
      %26 = vsyncadd [#allocation6], 0
      %s27 = sshll.u32 %s1, 4
      %s28 = int_to_ptr.hbm [resolvable:$true] %s27
      %s29 = sshll.u32 [#allocation5], 4
      %s30 = int_to_ptr.vmem [resolvable:$true] %s29
      %35 = dma.hbm_to_vmem [thread:$0]  %s28, 256, %s30, [#allocation6], 128, 128, 8
    $region9: #{tpu_custom_call.1} parent=1 // pred_fallthru
      _
    // Predicated region
    $region10: #{tpu_custom_call.1} parent=1 // pred_check
      _
    $region11: #{tpu_custom_call.1} parent=1 // pred_check_branch
      %37 = sbr.rel (0) target = $region13
    $region12: #{tpu_custom_call.1} parent=1 // pred_region
      %39 = dma.done [#allocation3], 256
    $region13: #{tpu_custom_call.1} parent=1 // pred_fallthru
      _
    // Predicated region
    $region14: #{tpu_custom_call.1} parent=1 // pred_check
      _
    $region15: #{tpu_custom_call.1} parent=1 // pred_check_branch
      %41 = sbr.rel (0) target = $region17
    $region16: #{tpu_custom_call.1} parent=1 // pred_region
      %43 = dma.done [#allocation6], 256
    $region17: #{tpu_custom_call.1} parent=1 // pred_fallthru
      _
    %v44 = vld [vmem:[#allocation2] sm:$0xff]
    %v45 = vld [vmem:[#allocation2 + $0x8] sm:$0xff]
    %v46 = vld [vmem:[#allocation5] sm:$0xff]
    %v47 = vld [vmem:[#allocation5 + $0x8] sm:$0xff]
    %v48 = vand.u32 2147483647, %v44
    %v49 = vand.u32 2147483647, %v45
    %v50 = vsub.f32 0.0, %v48
    %v51 = vsub.f32 0.0, %v49
    %v52 = vmul.f32 %v50, 1.442695
    %v53 = vpow.pop %v52
    %v54 = vmul.f32 %v51, 1.442695
    %v55 = vpow.pop %v54
    %v56 = vmax.f32 %v44, 0.0
    %v57 = vmax.f32 %v45, 0.0
    %v58 = vmul.f32 %v44, %v46
    %v59 = vmul.f32 %v45, %v47
    %v60 = vsub.f32 %v56, %v58
    %v61 = vsub.f32 %v57, %v59
    %v62 = vadd.f32 %v53, 1.0
    %v63 = vlog2.pop %v62
    %v64 = vmul.f32 %v63, 0.6931472
    %v65 = vmul.f32 -0.5, %v53
    %v66 = vadd.f32 %v65, 1.0
    %v67 = vmul.f32 %v66, %v53
    %v68 = vand.u32 2147483647, %v53
    %vm69 = vcmp.lt.f32.partialorder %v68, 0.0004427343
    %v70 = vsel %vm69, %v67, %v64
    %v71 = vadd.f32 %v55, 1.0
    %v72 = vlog2.pop %v71
    %v73 = vmul.f32 %v72, 0.6931472
    %v74 = vmul.f32 -0.5, %v55
    %v75 = vadd.f32 %v74, 1.0
    %v76 = vmul.f32 %v75, %v55
    %v77 = vand.u32 2147483647, %v55
    %vm78 = vcmp.lt.f32.partialorder %v77, 0.0004427343
    %v79 = vsel %vm78, %v76, %v73
    %v80 = vadd.f32 %v60, %v70
    %v81 = vadd.f32 %v61, %v79
    %v82 = vadd.f32 %v53, 1.0
    %v83 = vadd.f32 %v55, 1.0
    %v84 = vrcp.pop %v82
    %v85 = vmul.f32 %v82, %v84
    %v86 = vsub.f32 1.0, %v85
    %v87 = vmul.f32 %v84, %v86
    %v88 = vadd.f32 %v84, %v87
    %vm89 = vweird.f32 %v82
    %vm90 = vweird.f32 %v84
    %vm91 = vmor %vm89, %vm90
    %v92 = vsel %vm91, %v84, %v88
    %v93 = vand.u32 2147483647, %v82
    %vm94 = vcmp.eq.f32.partialorder %v93, 8.507059e+37
    %v95 = vand.u32 %v82, 2147483648
    %v96 = vor.u32 1.1754944e-38, %v95
    %v97 = vsel %vm94, %v96, %v92
    %v98 = vmul.f32 1.0, %v97
    %v99 = vrcp.pop %v83
    %v100 = vmul.f32 %v83, %v99
    %v101 = vsub.f32 1.0, %v100
    %v102 = vmul.f32 %v99, %v101
    %v103 = vadd.f32 %v99, %v102
    %vm104 = vweird.f32 %v83
    %vm105 = vweird.f32 %v99
    %vm106 = vmor %vm104, %vm105
    %v107 = vsel %vm106, %v99, %v103
    %v108 = vand.u32 2147483647, %v83
    %vm109 = vcmp.eq.f32.partialorder %v108, 8.507059e+37
    %v110 = vand.u32 %v83, 2147483648
    %v111 = vor.u32 1.1754944e-38, %v110
    %v112 = vsel %vm109, %v111, %v107
    %v113 = vmul.f32 1.0, %v112
    %vm114 = vcmp.ge.f32.partialorder %v44, 0.0
    %vm115 = vcmp.ge.f32.partialorder %v45, 0.0
    %v116 = vmul.f32 %v53, %v98
    %v117 = vmul.f32 %v55, %v113
    %v118 = vsel %vm114, %v98, %v116
    %v119 = vsel %vm115, %v113, %v117
    %vm120 = vcmp.eq.f32.partialorder %v46, 1.0
    %vm121 = vcmp.eq.f32.partialorder %v47, 1.0
    %v122 = vsel %vm120, 1, 0
    %v123 = vsel %vm121, 1, 0
    %v124 = vcvt.s32.f32 %v122
    %v125 = vcvt.s32.f32 %v123
    %v126 = vadd.f32 %v80, %v81
    %127 = vst [vmem:[#allocation7] sm:$0xff] %v126
    %v128 = vmul.f32 %v118, %v124
    %v129 = vmul.f32 %v119, %v125
    %v130 = vadd.f32 %v128, %v129
    %s131 = scalar_lea.vmem [#allocation7], 8
    %132 = vst [vmem:[%s131] sm:$0xff] %v130
    %v133 = vadd.f32 %v118, %v124
    %v134 = vadd.f32 %v119, %v125
    %v135 = vadd.f32 %v133, %v134
    %s136 = scalar_lea.vmem [#allocation7], 16
    %137 = vst [vmem:[%s136] sm:$0xff] %v135
    // Predicated region
    $region18: #{tpu_custom_call.1} parent=1 // pred_check
      _
    $region19: #{tpu_custom_call.1} parent=1 // pred_check_branch
      %139 = sbr.rel (0) target = $region21
    $region20: #{tpu_custom_call.1} parent=1 // pred_region
      %141 = vsyncadd [#allocation4], 0
      %s142 = sshll.u32 [#allocation7], 4
      %s143 = int_to_ptr.vmem [resolvable:$true] %s142
      %s144 = sshll.u32 %s2, 4
      %s145 = int_to_ptr.hbm [resolvable:$true] %s144
      %150 = dma.vmem_to_hbm [thread:$0]  %s143, 384, %s145, [#allocation4], 128, 128, 8
    $region21: #{tpu_custom_call.1} parent=1 // pred_fallthru
      _
    // Predicated region
    $region22: #{tpu_custom_call.1} parent=1 // pred_check
      _
    $region23: #{tpu_custom_call.1} parent=1 // pred_check_branch
      %152 = sbr.rel (0) target = $region25
    $region24: #{tpu_custom_call.1} parent=1 // pred_region
      %154 = dma.done [#allocation4], 384
    $region25: #{tpu_custom_call.1} parent=1 // pred_fallthru
      _
    %155 = vsyncpa [#allocation3], 1
    %156 = vsyncpa [#allocation6], 1
    %157 = vsyncpa [#allocation4], 1

</llo_original>
